<compile_context>
chip_gen: v7x
topology: tpu7x:2x2x1
jax: 0.10.0
libtpu: 0.0.40
codegen_flags: <defaults>
</compile_context>

<pallas_src>
import jax
import jax.numpy as jnp
import numpy as np
from jax.experimental import pallas as pl
from jax.experimental.pallas import tpu as pltpu

KERNEL_SIZE = 100
PADDING = 50
CONV_CHANNELS = 10


# ----------------------------- Pallas kernel ---------------------------------
def _cba_kernel(ps_ref, h_ref, aw_ref, m_ref,
                whe_ref, wcf_ref, wee_ref, bee_ref,
                g_ref, aout_ref):
    Bb, T, D2 = h_ref.shape
    K = aw_ref.shape[-1]

    h3 = h_ref[...]                                    # (Bb, T, D2)  (f32 or bf16)
    h2 = h3.reshape(Bb * T, D2)                        # cheap: T multiple of 8
    aw2 = aw_ref[...].reshape(Bb * T, K)

    # Big MXU matmuls over Bb*T rows: L_he(h)  and  (Conv1d ∘ L_fe)(alpha)
    ph = jnp.dot(h2, whe_ref[...], preferred_element_type=jnp.float32)
    pf = jnp.dot(aw2, wcf_ref[...], preferred_element_type=jnp.float32)

    # ps already contains L_se(s) + b_se + b_he + b_fe; broadcast over frames.
    z3 = jnp.tanh((ph + pf).reshape(Bb, T, D2) + ps_ref[...])          # (Bb, T, D2) f32

    # e scores, lane-dense (Bb, 1, T), via the MXU (flash 'bqd,bkd->bqk' pattern)
    wee_b = jnp.broadcast_to(wee_ref[...].reshape(1, 1, D2), (Bb, 1, D2))
    e = jnp.einsum('bqd,btd->bqt', wee_b, z3,
                   preferred_element_type=jnp.float32) + bee_ref[0]    # (Bb, 1, T)

    # masked, max-shifted softmax over the frame (lane) axis
    m = m_ref[...]                                                     # (Bb, 1, T)
    e_max = jnp.max(e, axis=-1, keepdims=True)
    e_cared = jnp.exp(e - e_max) * m
    alpha = e_cared / jnp.sum(e_cared, axis=-1, keepdims=True)         # (Bb, 1, T)

    aout_ref[...] = alpha                                              # lane-dense store

    # g = alpha @ h  per batch element (flash 'bqk,bkd->bqd' pattern, MXU)
    g_ref[...] = jnp.einsum('bqt,btd->bqd', alpha.astype(h3.dtype), h3,
                            preferred_element_type=jnp.float32).astype(g_ref.dtype)


# ------------------------------- glue ----------------------------------------
def _im2col_alpha(alpha, t_len):
    """alpha: (B, 1, Tin) -> windows (B, T, K) with
    win[b, t, k] = alpha[b, 0, t + k - PADDING] (0 where the tap is out of range),
    which reproduces Conv1d(padding=50) output frames 0..T-1."""
    B, _, tin = alpha.shape
    a = alpha[:, 0, :]                                                 # (B, Tin)
    pad_back = max(0, (t_len - 1 + KERNEL_SIZE) - (tin + PADDING))
    a_pad = jnp.pad(a, ((0, 0), (PADDING, pad_back)))
    idx = jnp.arange(t_len)[:, None] + jnp.arange(KERNEL_SIZE)[None, :]  # (T, K)
    return a_pad[:, idx]                                               # (B, T, K)


def content_based_attention(s, h_batch, alpha, attn_mask, params,
                            block_b=None, matmul_dtype=jnp.float32):
    B, T, D2 = h_batch.shape
    Tin = alpha.shape[-1]
    assert Tin + 2 * PADDING - KERNEL_SIZE + 1 >= T, "conv output shorter than frames_len"
    f32 = jnp.float32

    # ---- hoisted, T-independent work (one XLA matmul for the whole batch) ----
    ps = (s.astype(f32) @ params["W_se"].astype(f32).T
          + params["b_se"].astype(f32)
          + params["b_he"].astype(f32)
          + params["b_fe"].astype(f32)).reshape(B, 1, D2)

    # Conv1d + L_fe folded into one (K, 2H) weight; alpha -> im2col windows.
    awin = _im2col_alpha(alpha.astype(f32), T)                         # (B, T, K)
    wcf = params["conv_w"][:, 0, :].astype(f32).T @ params["W_fe"].astype(f32).T  # (K, D2)

    whe = params["W_he"].astype(f32).T                                 # (D2, D2)
    wee = params["W_ee"].reshape(1, D2).astype(f32)                    # (1, D2)
    bee = params["b_ee"].reshape(1).astype(f32)                        # (1,) -> SMEM

    mask_lane = jnp.transpose(attn_mask.astype(f32), (0, 2, 1))        # (B, 1, T)

    # optional bf16 for the big streamed operand + matmul weights (f32 accumulate)
    h3 = h_batch.astype(matmul_dtype)
    whe = whe.astype(matmul_dtype)
    awin = awin.astype(matmul_dtype)
    wcf = wcf.astype(matmul_dtype)

    # ---- batch blocking: aim for >=256 MXU rows per grid step ----------------
    if block_b is None:
        block_b = max(1, min(B, (256 + T - 1) // T))
    Bp = ((B + block_b - 1) // block_b) * block_b
    if Bp != B:
        pad = Bp - B
        ps = jnp.pad(ps, ((0, pad), (0, 0), (0, 0)))
        h3 = jnp.pad(h3, ((0, pad), (0, 0), (0, 0)))
        awin = jnp.pad(awin, ((0, pad), (0, 0), (0, 0)))
        mask_lane = jnp.pad(mask_lane, ((0, pad), (0, 0), (0, 0)), constant_values=1.0)
    nb = Bp // block_b

    in_specs = [
        pl.BlockSpec((block_b, 1, D2), lambda b: (b, 0, 0)),           # ps (= L_se(s)+biases)
        pl.BlockSpec((block_b, T, D2), lambda b: (b, 0, 0)),           # h
        pl.BlockSpec((block_b, T, KERNEL_SIZE), lambda b: (b, 0, 0)),  # alpha im2col windows
        pl.BlockSpec((block_b, 1, T), lambda b: (b, 0, 0)),            # mask (lane-dense)
        pl.BlockSpec((D2, D2), lambda b: (0, 0)),                      # W_he^T
        pl.BlockSpec((KERNEL_SIZE, D2), lambda b: (0, 0)),             # fused conv∘fe weight
        pl.BlockSpec((1, D2), lambda b: (0, 0)),                       # W_ee row
        pl.BlockSpec(memory_space=pltpu.MemorySpace.SMEM),             # b_ee scalar
    ]
    out_specs = (
        pl.BlockSpec((block_b, 1, D2), lambda b: (b, 0, 0)),           # g
        pl.BlockSpec((block_b, 1, T), lambda b: (b, 0, 0)),            # alpha (lane-dense)
    )
    out_shape = (
        jax.ShapeDtypeStruct((Bp, 1, D2), f32),
        jax.ShapeDtypeStruct((Bp, 1, T), f32),
    )

    g3, a_lane = pl.pallas_call(
        _cba_kernel,
        out_shape=out_shape,
        grid_spec=pltpu.PrefetchScalarGridSpec(
            num_scalar_prefetch=0,
            grid=(nb,),
            in_specs=in_specs,
            out_specs=out_specs,
        ),
        compiler_params=pltpu.CompilerParams(dimension_semantics=("parallel",)),
    )(ps, h3, awin, mask_lane, whe, wcf, wee, bee)

    g = g3[:B, 0, :]                        # (B, 2H)
    alpha_out = a_lane[:B]                  # (B, 1, T) -- already PyTorch's output layout
    return g, alpha_out


# --------------------------- reference (pure JAX) -----------------------------
def reference_forward(s, h_batch, alpha, attn_mask, p):
    T = h_batch.shape[1]
    conved = jax.lax.conv_general_dilated(
        alpha, p["conv_w"], window_strides=(1,), padding=[(PADDING, PADDING)],
        dimension_numbers=("NCH", "OIH", "NCH"))
    conved = jnp.transpose(conved, (0, 2, 1))[:, :T, :]
    lin = lambda x, W, b: jnp.matmul(x, W.T) + b
    e = lin(jnp.tanh(lin(s, p["W_se"], p["b_se"])[:, None, :]
                     + lin(h_batch, p["W_he"], p["b_he"])
                     + lin(conved, p["W_fe"], p["b_fe"])),
            p["W_ee"], p["b_ee"])
    e_max = jnp.max(e, axis=1, keepdims=True)
    e_cared = jnp.exp(e - e_max) * attn_mask
    alpha_new = e_cared / jnp.sum(e_cared, axis=1, keepdims=True)
    g = jnp.sum(alpha_new * h_batch, axis=1)
    return g, jnp.transpose(alpha_new, (0, 2, 1))


def init_params(key, hidden_size):
    H, D2, C = hidden_size, 2 * hidden_size, CONV_CHANNELS
    ks = jax.random.split(key, 9)
    u = lambda k, shape, fan_in: jax.random.uniform(
        k, shape, jnp.float32, -1.0 / np.sqrt(fan_in), 1.0 / np.sqrt(fan_in))
    return {
        "W_se": u(ks[0], (D2, H), H),   "b_se": u(ks[1], (D2,), H),
        "W_he": u(ks[2], (D2, D2), D2), "b_he": u(ks[3], (D2,), D2),
        "W_fe": u(ks[4], (D2, C), C),   "b_fe": u(ks[5], (D2,), C),
        "W_ee": u(ks[6], (1, D2), D2),  "b_ee": u(ks[7], (1,), D2),
        "conv_w": u(ks[8], (C, 1, KERNEL_SIZE), KERNEL_SIZE),
    }


if __name__ == "__main__":
    B, H, T = 2, 32, 8          # batch, hidden_size, frames_len
    D2 = 2 * H

    key = jax.random.PRNGKey(0)
    kp, k1, k2, k3 = jax.random.split(key, 4)
    params = init_params(kp, H)

    s = jax.random.normal(k1, (B, H), jnp.float32)
    h_batch = jax.random.normal(k2, (B, T, D2), jnp.float32)
    alpha = jax.nn.softmax(jax.random.normal(k3, (B, 1, T), jnp.float32), axis=-1)
    attn_mask = jnp.ones((B, T, 1), jnp.float32).at[1, 6:, 0].set(0.0)

    g_ref, alpha_ref = reference_forward(s, h_batch, alpha, attn_mask, params)

    # f32 matmul path: must match the reference tightly.
    g, alpha_out = content_based_attention(s, h_batch, alpha, attn_mask, params)
    jax.block_until_ready((g, alpha_out))
    np.testing.assert_allclose(np.asarray(g), np.asarray(g_ref), rtol=1e-4, atol=1e-4)
    np.testing.assert_allclose(np.asarray(alpha_out), np.asarray(alpha_ref), rtol=1e-4, atol=1e-4)

    # bf16 matmul path (halves HBM->VMEM bytes for h, doubles MXU throughput);
    # elementwise math stays f32, so only matmul rounding differs.
    g_bf, a_bf = content_based_attention(s, h_batch, alpha, attn_mask, params,
                                         matmul_dtype=jnp.bfloat16)
    jax.block_until_ready((g_bf, a_bf))
    np.testing.assert_allclose(np.asarray(g_bf), np.asarray(g_ref), rtol=5e-2, atol=5e-2)
    np.testing.assert_allclose(np.asarray(a_bf), np.asarray(alpha_ref), rtol=5e-2, atol=5e-2)

    print("KERNEL_OK")
</pallas_src>

<mosaic_0001>
module attributes {stable_mosaic.version = 11 : i64} {
  func.func @_cba_kernel(%arg0: i32, %arg1: memref<2x1x64xf32, #tpu.memory_space<vmem>>, %arg2: memref<2x8x64xf32, #tpu.memory_space<vmem>>, %arg3: memref<2x8x100xf32, #tpu.memory_space<vmem>>, %arg4: memref<2x1x8xf32, #tpu.memory_space<vmem>>, %arg5: memref<64x64xf32, #tpu.memory_space<vmem>>, %arg6: memref<100x64xf32, #tpu.memory_space<vmem>>, %arg7: memref<1x64xf32, #tpu.memory_space<vmem>>, %arg8: memref<1xf32, #tpu.memory_space<smem>>, %arg9: memref<2x1x64xf32, #tpu.memory_space<vmem>>, %arg10: memref<2x1x8xf32, #tpu.memory_space<vmem>>) attributes {dimension_semantics = [#tpu.dimension_semantics<parallel>], iteration_bounds = array<i64: 1>, scalar_prefetch = 0 : i64, scratch_operands = 0 : i64, tpu.core_type = #tpu.core_type<tc>, window_params = [{transform_indices = @transform_0, window_bounds = array<i64: 2, 1, 64>}, {transform_indices = @transform_1, window_bounds = array<i64: 2, 8, 64>}, {transform_indices = @transform_2, window_bounds = array<i64: 2, 8, 100>}, {transform_indices = @transform_3, window_bounds = array<i64: 2, 1, 8>}, {pipeline_mode = #tpu.pipeline_mode<synchronous>, transform_indices = @transform_4, window_bounds = array<i64: 64, 64>}, {pipeline_mode = #tpu.pipeline_mode<synchronous>, transform_indices = @transform_5, window_bounds = array<i64: 100, 64>}, {pipeline_mode = #tpu.pipeline_mode<synchronous>, transform_indices = @transform_6, window_bounds = array<i64: 1, 64>}, {transform_indices = @transform_7, window_bounds = array<i64: 1>}, {transform_indices = @transform_8, window_bounds = array<i64: 2, 1, 64>}, {transform_indices = @transform_9, window_bounds = array<i64: 2, 1, 8>}]} {
    %c0 = arith.constant 0 : index
    %c0_0 = arith.constant 0 : index
    %c0_1 = arith.constant 0 : index
    %0 = vector.load %arg2[%c0, %c0_0, %c0_1] : memref<2x8x64xf32, #tpu.memory_space<vmem>>, vector<2x8x64xf32>
    %1 = vector.shape_cast %0 : vector<2x8x64xf32> to vector<16x64xf32>
    %c0_2 = arith.constant 0 : index
    %c0_3 = arith.constant 0 : index
    %c0_4 = arith.constant 0 : index
    %2 = vector.load %arg3[%c0_2, %c0_3, %c0_4] : memref<2x8x100xf32, #tpu.memory_space<vmem>>, vector<2x8x100xf32>
    %3 = vector.shape_cast %2 : vector<2x8x100xf32> to vector<16x100xf32>
    %c0_5 = arith.constant 0 : index
    %c0_6 = arith.constant 0 : index
    %4 = vector.load %arg5[%c0_5, %c0_6] : memref<64x64xf32, #tpu.memory_space<vmem>>, vector<64x64xf32>
    %cst = arith.constant dense<0.000000e+00> : vector<16x64xf32>
    %5 = tpu.matmul %1, %4, %cst {dimension_numbers = #tpu.dot_dimension_numbers<[1], [0], [0], [1], [0, 0, 1, 1], [], []>} : vector<16x64xf32>, vector<64x64xf32>, vector<16x64xf32> -> vector<16x64xf32>
    %c0_7 = arith.constant 0 : index
    %c0_8 = arith.constant 0 : index
    %6 = vector.load %arg6[%c0_7, %c0_8] : memref<100x64xf32, #tpu.memory_space<vmem>>, vector<100x64xf32>
    %cst_9 = arith.constant dense<0.000000e+00> : vector<16x64xf32>
    %7 = tpu.matmul %3, %6, %cst_9 {dimension_numbers = #tpu.dot_dimension_numbers<[1], [0], [0], [1], [0, 0, 1, 1], [], []>} : vector<16x100xf32>, vector<100x64xf32>, vector<16x64xf32> -> vector<16x64xf32>
    %8 = arith.addf %5, %7 : vector<16x64xf32>
    %9 = vector.shape_cast %8 : vector<16x64xf32> to vector<2x8x64xf32>
    %c0_10 = arith.constant 0 : index
    %c0_11 = arith.constant 0 : index
    %c0_12 = arith.constant 0 : index
    %10 = vector.load %arg1[%c0_10, %c0_11, %c0_12] : memref<2x1x64xf32, #tpu.memory_space<vmem>>, vector<2x1x64xf32>
    %11 = vector.broadcast %10 : vector<2x1x64xf32> to vector<2x8x64xf32>
    %12 = arith.addf %9, %11 : vector<2x8x64xf32>
    %13 = math.tanh %12 : vector<2x8x64xf32>
    %c0_13 = arith.constant 0 : index
    %c0_14 = arith.constant 0 : index
    %14 = vector.load %arg7[%c0_13, %c0_14] : memref<1x64xf32, #tpu.memory_space<vmem>>, vector<1x64xf32>
    %15 = vector.shape_cast %14 : vector<1x64xf32> to vector<1x1x64xf32>
    %16 = vector.shape_cast %15 : vector<1x1x64xf32> to vector<1x1x64xf32>
    %17 = vector.broadcast %16 : vector<1x1x64xf32> to vector<2x1x64xf32>
    "tpu.trace_start"() <{level = 10 : i32, message = "bqd,btd->bqt"}> : () -> ()
    %cst_15 = arith.constant dense<0.000000e+00> : vector<2x1x8xf32>
    %18 = tpu.matmul %17, %13, %cst_15 {dimension_numbers = #tpu.dot_dimension_numbers<[2], [2], [1], [1], [0, 0, 0, 1, 1, 1], [0], [0]>} : vector<2x1x64xf32>, vector<2x8x64xf32>, vector<2x1x8xf32> -> vector<2x1x8xf32>
    "tpu.trace_stop"() : () -> ()
    %c0_16 = arith.constant 0 : index
    %19 = memref.load %arg8[%c0_16] : memref<1xf32, #tpu.memory_space<smem>>
    %20 = vector.broadcast %19 : f32 to vector<2x1x8xf32>
    %21 = arith.addf %18, %20 : vector<2x1x8xf32>
    %c0_17 = arith.constant 0 : index
    %c0_18 = arith.constant 0 : index
    %c0_19 = arith.constant 0 : index
    %22 = vector.load %arg4[%c0_17, %c0_18, %c0_19] : memref<2x1x8xf32, #tpu.memory_space<vmem>>, vector<2x1x8xf32>
    %cst_20 = arith.constant dense<0xFF800000> : vector<2x1xf32>
    %23 = vector.multi_reduction <maximumf>, %21, %cst_20 [2] : vector<2x1x8xf32> to vector<2x1xf32>
    %24 = vector.shape_cast %23 : vector<2x1xf32> to vector<2x1x1xf32>
    %25 = vector.broadcast %24 : vector<2x1x1xf32> to vector<2x1x8xf32>
    %26 = arith.subf %21, %25 : vector<2x1x8xf32>
    %27 = math.exp %26 : vector<2x1x8xf32>
    %28 = arith.mulf %27, %22 : vector<2x1x8xf32>
    %cst_21 = arith.constant dense<0.000000e+00> : vector<2x1xf32>
    %29 = vector.multi_reduction <add>, %28, %cst_21 [2] : vector<2x1x8xf32> to vector<2x1xf32>
    %30 = vector.shape_cast %29 : vector<2x1xf32> to vector<2x1x1xf32>
    %31 = vector.broadcast %30 : vector<2x1x1xf32> to vector<2x1x8xf32>
    %32 = arith.divf %28, %31 : vector<2x1x8xf32>
    %c0_22 = arith.constant 0 : index
    %c0_23 = arith.constant 0 : index
    %c0_24 = arith.constant 0 : index
    %33 = vector.load %arg10[%c0_22, %c0_23, %c0_24] : memref<2x1x8xf32, #tpu.memory_space<vmem>>, vector<2x1x8xf32>
    tpu.vector_store %arg10[%c0_22, %c0_23, %c0_24], %32 {strides = array<i32>} : memref<2x1x8xf32, #tpu.memory_space<vmem>>, vector<2x1x8xf32>,
    "tpu.trace_start"() <{level = 10 : i32, message = "bqt,btd->bqd"}> : () -> ()
    %cst_25 = arith.constant dense<0.000000e+00> : vector<2x1x64xf32>
    %34 = tpu.matmul %32, %0, %cst_25 {dimension_numbers = #tpu.dot_dimension_numbers<[2], [1], [1], [2], [0, 0, 0, 1, 1, 2], [0], [0]>} : vector<2x1x8xf32>, vector<2x8x64xf32>, vector<2x1x64xf32> -> vector<2x1x64xf32>
    "tpu.trace_stop"() : () -> ()
    %c0_26 = arith.constant 0 : index
    %c0_27 = arith.constant 0 : index
    %c0_28 = arith.constant 0 : index
    %35 = vector.load %arg9[%c0_26, %c0_27, %c0_28] : memref<2x1x64xf32, #tpu.memory_space<vmem>>, vector<2x1x64xf32>
    tpu.vector_store %arg9[%c0_26, %c0_27, %c0_28], %34 {strides = array<i32>} : memref<2x1x64xf32, #tpu.memory_space<vmem>>, vector<2x1x64xf32>,
    return
  }
  func.func @transform_0(%arg0: i32) -> (i32, i32, i32) {
    %c0_i32 = arith.constant 0 : i32
    %c0_i32_0 = arith.constant 0 : i32
    %c0_i32_1 = arith.constant 0 : i32
    return %arg0, %c0_i32, %c0_i32_0 : i32, i32, i32
  }
  func.func @transform_1(%arg0: i32) -> (i32, i32, i32) {
    %c0_i32 = arith.constant 0 : i32
    %c0_i32_0 = arith.constant 0 : i32
    %c0_i32_1 = arith.constant 0 : i32
    return %arg0, %c0_i32, %c0_i32_0 : i32, i32, i32
  }
  func.func @transform_2(%arg0: i32) -> (i32, i32, i32) {
    %c0_i32 = arith.constant 0 : i32
    %c0_i32_0 = arith.constant 0 : i32
    %c0_i32_1 = arith.constant 0 : i32
    return %arg0, %c0_i32, %c0_i32_0 : i32, i32, i32
  }
  func.func @transform_3(%arg0: i32) -> (i32, i32, i32) {
    %c0_i32 = arith.constant 0 : i32
    %c0_i32_0 = arith.constant 0 : i32
    %c0_i32_1 = arith.constant 0 : i32
    return %arg0, %c0_i32, %c0_i32_0 : i32, i32, i32
  }
  func.func @transform_4(%arg0: i32) -> (i32, i32) {
    %c0_i32 = arith.constant 0 : i32
    %c0_i32_0 = arith.constant 0 : i32
    %c0_i32_1 = arith.constant 0 : i32
    return %c0_i32, %c0_i32_0 : i32, i32
  }
  func.func @transform_5(%arg0: i32) -> (i32, i32) {
    %c0_i32 = arith.constant 0 : i32
    %c0_i32_0 = arith.constant 0 : i32
    %c0_i32_1 = arith.constant 0 : i32
    return %c0_i32, %c0_i32_0 : i32, i32
  }
  func.func @transform_6(%arg0: i32) -> (i32, i32) {
    %c0_i32 = arith.constant 0 : i32
    %c0_i32_0 = arith.constant 0 : i32
    %c0_i32_1 = arith.constant 0 : i32
    return %c0_i32, %c0_i32_0 : i32, i32
  }
  func.func @transform_7(%arg0: i32) -> i32 {
    %c0_i32 = arith.constant 0 : i32
    %c0_i32_0 = arith.constant 0 : i32
    return %c0_i32 : i32
  }
  func.func @transform_8(%arg0: i32) -> (i32, i32, i32) {
    %c0_i32 = arith.constant 0 : i32
    %c0_i32_0 = arith.constant 0 : i32
    %c0_i32_1 = arith.constant 0 : i32
    return %arg0, %c0_i32, %c0_i32_0 : i32, i32, i32
  }
  func.func @transform_9(%arg0: i32) -> (i32, i32, i32) {
    %c0_i32 = arith.constant 0 : i32
    %c0_i32_0 = arith.constant 0 : i32
    %c0_i32_1 = arith.constant 0 : i32
    return %arg0, %c0_i32, %c0_i32_0 : i32, i32, i32
  }
}

</mosaic_0001>

<llo_original>
// kernel: tpu_custom_call.1
$region0: #{tpu_custom_call.1}
  #allocation0 [shape = 'u32[]', space=smem, size = 0x4, offset = 0x4, fixed_abs, tag = 'smem constant byte address 0x4 - core index']
  #allocation1 [shape = 'u32[144,128]{1,0:T(1,128)}', space=vmem, size = 0x12000, scoped, tag = 'internal scratch']
  #allocation2 [shape = 'f32[1]{0:T(128)S(6)}', space=smem, size = 0x200, scoped, tag = 'scoped memory for tpu_custom_call.1']
  %s0 = inlined_call_operand.vmem [shape: f32[2,1,64], index: 0, kind: input, shape index: {}]
  %s1 = inlined_call_operand.vmem [shape: f32[2,8,64], index: 1, kind: input, shape index: {}]
  %s2 = inlined_call_operand.vmem [shape: f32[2,8,100], index: 2, kind: input, shape index: {}]
  %s3 = inlined_call_operand.vmem [shape: f32[2,1,8], index: 3, kind: input, shape index: {}]
  %s4 = inlined_call_operand.vmem [shape: f32[64,64], index: 4, kind: input, shape index: {}]
  %s5 = inlined_call_operand.vmem [shape: f32[100,64], index: 5, kind: input, shape index: {}]
  %s6 = inlined_call_operand.vmem [shape: f32[1,64], index: 6, kind: input, shape index: {}]
  %s7 = inlined_call_operand.<no memory space> [shape: f32[1], index: 7, kind: input, shape index: {}]
  %s8 = inlined_call_operand.hbm [shape: f32[2,1,64], index: 8, kind: output, shape index: {0}]
  %s9 = inlined_call_operand.hbm [shape: f32[2,1,8], index: 9, kind: output, shape index: {1}]
  %10 = xla_tuple %s8, %s9
  %s11 = sld [smem:[#allocation0]]
  $region50: #{tpu_custom_call.1} parent=0
    _
  %s13 = ssub.s32 1, %s11
  %s14 = scalar_select 0, %s13, %s11
  %15 = sst [smem:[#allocation2]] %s7
  $region1: #{tpu_custom_call.1} parent=0
    #allocation3 [shape = 'u8[1024]{0}', space=vmem, size = 0x400, scoped, tag = 'output window, operand 0, single buffered']
    #allocation4 [shape = 's32[1]{0}', space=sflag, size = 0x4, scoped, tag = 'scoped memory for tpu_custom_call.1']
    #allocation5 [shape = 'u8[1024]{0}', space=vmem, size = 0x400, scoped, tag = 'output window, operand 1, single buffered']
    #allocation6 [shape = 's32[1]{0}', space=sflag, size = 0x4, scoped, tag = 'scoped memory for tpu_custom_call.1']
    %16 = vsyncpa [#allocation4], 0
    %17 = vsyncpa [#allocation6], 0
    // Predicated region
    $region2: #{tpu_custom_call.1} parent=1 // pred_check
      _
    $region3: #{tpu_custom_call.1} parent=1 // pred_check_branch
      %19 = sbr.rel (0) target = $region5
    $region4: #{tpu_custom_call.1} parent=1 // pred_region
      _
    $region5: #{tpu_custom_call.1} parent=1 // pred_fallthru
      _
    // Predicated region
    $region6: #{tpu_custom_call.1} parent=1 // pred_check
      _
    $region7: #{tpu_custom_call.1} parent=1 // pred_check_branch
      %21 = sbr.rel (0) target = $region9
    $region8: #{tpu_custom_call.1} parent=1 // pred_region
      _
    $region9: #{tpu_custom_call.1} parent=1 // pred_fallthru
      _
    // Predicated region
    $region10: #{tpu_custom_call.1} parent=1 // pred_check
      _
    $region11: #{tpu_custom_call.1} parent=1 // pred_check_branch
      %23 = sbr.rel (0) target = $region13
    $region12: #{tpu_custom_call.1} parent=1 // pred_region
      _
    $region13: #{tpu_custom_call.1} parent=1 // pred_fallthru
      _
    // Predicated region
    $region14: #{tpu_custom_call.1} parent=1 // pred_check
      _
    $region15: #{tpu_custom_call.1} parent=1 // pred_check_branch
      %25 = sbr.rel (0) target = $region17
    $region16: #{tpu_custom_call.1} parent=1 // pred_region
      _
    $region17: #{tpu_custom_call.1} parent=1 // pred_fallthru
      _
    // Predicated region
    $region18: #{tpu_custom_call.1} parent=1 // pred_check
      _
    $region19: #{tpu_custom_call.1} parent=1 // pred_check_branch
      %27 = sbr.rel (0) target = $region21
    $region20: #{tpu_custom_call.1} parent=1 // pred_region
      _
    $region21: #{tpu_custom_call.1} parent=1 // pred_fallthru
      _
    // Predicated region
    $region22: #{tpu_custom_call.1} parent=1 // pred_check
      _
    $region23: #{tpu_custom_call.1} parent=1 // pred_check_branch
      %29 = sbr.rel (0) target = $region25
    $region24: #{tpu_custom_call.1} parent=1 // pred_region
      _
    $region25: #{tpu_custom_call.1} parent=1 // pred_fallthru
      _
    // Predicated region
    $region26: #{tpu_custom_call.1} parent=1 // pred_check
      _
    $region27: #{tpu_custom_call.1} parent=1 // pred_check_branch
      %31 = sbr.rel (0) target = $region29
    $region28: #{tpu_custom_call.1} parent=1 // pred_region
      _
    $region29: #{tpu_custom_call.1} parent=1 // pred_fallthru
      _
    // Predicated region
    $region30: #{tpu_custom_call.1} parent=1 // pred_check
      _
    $region31: #{tpu_custom_call.1} parent=1 // pred_check_branch
      %33 = sbr.rel (0) target = $region33
    $region32: #{tpu_custom_call.1} parent=1 // pred_region
      _
    $region33: #{tpu_custom_call.1} parent=1 // pred_fallthru
      _
    %v34 = vld [vmem:[%s1] sm:$0xff]
    %v35 = vld [vmem:[%s1 + $0x8] sm:$0xff]
    %v36 = vld [vmem:[%s2] sm:$0xff]
    %v37 = vld [vmem:[%s2 + $0x8] sm:$0xff]
    %v38 = vld [vmem:[%s4] sm:$0xff]
    %v39 = vld [vmem:[%s4 + $0x8] sm:$0xff]
    %v40 = vld [vmem:[%s4 + $0x10] sm:$0xff]
    %v41 = vld [vmem:[%s4 + $0x18] sm:$0xff]
    %v42 = vld [vmem:[%s4 + $0x20] sm:$0xff]
    %v43 = vld [vmem:[%s4 + $0x28] sm:$0xff]
    %v44 = vld [vmem:[%s4 + $0x30] sm:$0xff]
    %v45 = vld [vmem:[%s4 + $0x38] sm:$0xff]
    %v46 = vld [vmem:[%s5] sm:$0xff]
    %v47 = vld [vmem:[%s5 + $0x8] sm:$0xff]
    %v48 = vld [vmem:[%s5 + $0x10] sm:$0xff]
    %v49 = vld [vmem:[%s5 + $0x18] sm:$0xff]
    %v50 = vld [vmem:[%s5 + $0x20] sm:$0xff]
    %v51 = vld [vmem:[%s5 + $0x28] sm:$0xff]
    %v52 = vld [vmem:[%s5 + $0x30] sm:$0xff]
    %v53 = vld [vmem:[%s5 + $0x38] sm:$0xff]
    %v54 = vld [vmem:[%s5 + $0x40] sm:$0xff]
    %v55 = vld [vmem:[%s5 + $0x48] sm:$0xff]
    %v56 = vld [vmem:[%s5 + $0x50] sm:$0xff]
    %v57 = vld [vmem:[%s5 + $0x58] sm:$0xff]
    %v58 = vld [vmem:[%s5 + $0x60] sm:$0xf]
    %vm59 = vcmask 818176
    %v61 = vsel %vm59, %v36, 0
    %v64 = vsel %vm59, %v37, 0
    %vm66 = vcmask 1043456
    %v68 = vsel %vm66, %v58, 0
    %70 = vmatprep.subr.mxu0 0.0
    %71 = vmatpush1.msra.mxu0 %v46
    %72 = vmatprep.subr.mxu0 0.0
    %73 = vmatpush1.msra.mxu0 %v47
    %74 = vmatprep.subr.mxu0 0.0
    %75 = vmatpush1.msra.mxu0 %v48
    %76 = vmatprep.subr.mxu0 0.0
    %77 = vmatpush1.msra.mxu0 %v49
    %78 = vmatprep.subr.mxu0 0.0
    %79 = vmatpush1.msra.mxu0 %v50
    %80 = vmatprep.subr.mxu0 0.0
    %81 = vmatpush1.msra.mxu0 %v51
    %82 = vmatprep.subr.mxu0 0.0
    %83 = vmatpush1.msra.mxu0 %v52
    %84 = vmatprep.subr.mxu0 0.0
    %85 = vmatpush1.msra.mxu0 %v53
    %86 = vmatprep.subr.mxu0 0.0
    %87 = vmatpush1.msra.mxu0 %v54
    %88 = vmatprep.subr.mxu0 0.0
    %89 = vmatpush1.msra.mxu0 %v55
    %90 = vmatprep.subr.mxu0 0.0
    %91 = vmatpush1.msra.mxu0 %v56
    %92 = vmatprep.subr.mxu0 0.0
    %93 = vmatpush1.msra.mxu0 %v57
    %94 = vmatprep.subr.mxu0 0.0
    %95 = vmatpush1.msra.mxu0 %v68
    %96 = vmatprep.subr.mxu0 0.0
    %97 = vmatpush1.msra.mxu0 0.0
    %98 = vmatprep.subr.mxu0 0.0
    %99 = vmatpush1.msra.mxu0 0.0
    %100 = vmatprep.subr.mxu0 0.0
    %101 = vmatpush1.msra.mxu0 0.0
    %102 = vmatprep.subr.mxu0 0.0
    %103 = vmatpush1.msra.mxu0 0.0
    %104 = vmatprep.subr.mxu0 0.0
    %105 = vmatpush1.msra.mxu0 0.0
    %106 = vmatprep.subr.mxu0 0.0
    %107 = vmatpush1.msra.mxu0 0.0
    %108 = vmatprep.subr.mxu0 0.0
    %109 = vmatpush1.msra.mxu0 0.0
    %110 = vmatprep.subr.mxu0 0.0
    %111 = vmatpush1.msra.mxu0 0.0
    %112 = vmatprep.subr.mxu0 0.0
    %113 = vmatpush1.msra.mxu0 0.0
    %114 = vmatprep.subr.mxu0 0.0
    %115 = vmatpush1.msra.mxu0 0.0
    %116 = vmatprep.subr.mxu0 0.0
    %117 = vmatpush1.msra.mxu0 0.0
    %118 = vmatprep.subr.mxu0 0.0
    %119 = vmatpush1.msra.mxu0 0.0
    %120 = vmatprep.subr.mxu0 0.0
    %121 = vmatpush1.msra.mxu0 0.0
    %122 = vmatprep.subr.mxu0 0.0
    %123 = vmatpush1.msra.mxu0 0.0
    %124 = vmatprep.subr.mxu0 0.0
    %125 = vmatpush1.msra.mxu0 0.0
    %126 = vmatprep.subr.mxu0 0.0
    %127 = vmatpush1.msra.mxu0 0.0
    %128 = vmatprep.subr.mxu0 0.0
    %129 = vmatpush1.msra.mxu0 0.0
    %130 = vmatprep.subr.mxu0 0.0
    %131 = vmatpush1.msra.mxu0 0.0
    %132 = vmatprep.subr.mxu0 0.0
    %133 = vmatpush1.msra.mxu0 0.0
    %134 = vmatprep.mubr.f32.mxu0 0.0
    %135 = vmatmul.mubr.f32.gmra.mrb[0].mxu0 %v61
    %v136 = vpop.f32.mrb[0].mxu0
    %v137 = vadd.f32 0.0, %v136
    %v138 = vpop.f32.mrb[0].mxu0
    %139 = vmatprep.mubr.f32.mxu0 0.0
    %140 = vmatmul.mubr.f32.gmra.mrb[0].mxu0 %v64
    %v141 = vpop.f32.mrb[0].mxu0
    %v142 = vadd.f32 0.0, %v141
    %v143 = vpop.f32.mrb[0].mxu0
    %144 = vdwg.mxu0
    %vm145 = vcmask 523264
    %v147 = vsel %vm145, %v34, 0
    %v150 = vsel %vm145, %v35, 0
    %152 = vmatprep.subr.mxu0 0.0
    %153 = vmatpush1.msra.mxu0 %v38
    %154 = vmatprep.subr.mxu0 0.0
    %155 = vmatpush1.msra.mxu0 %v39
    %156 = vmatprep.subr.mxu0 0.0
    %157 = vmatpush1.msra.mxu0 %v40
    %158 = vmatprep.subr.mxu0 0.0
    %159 = vmatpush1.msra.mxu0 %v41
    %160 = vmatprep.subr.mxu0 0.0
    %161 = vmatpush1.msra.mxu0 %v42
    %162 = vmatprep.subr.mxu0 0.0
    %163 = vmatpush1.msra.mxu0 %v43
    %164 = vmatprep.subr.mxu0 0.0
    %165 = vmatpush1.msra.mxu0 %v44
    %166 = vmatprep.subr.mxu0 0.0
    %167 = vmatpush1.msra.mxu0 %v45
    %168 = vmatprep.subr.mxu0 0.0
    %169 = vmatpush1.msra.mxu0 0.0
    %170 = vmatprep.subr.mxu0 0.0
    %171 = vmatpush1.msra.mxu0 0.0
    %172 = vmatprep.subr.mxu0 0.0
    %173 = vmatpush1.msra.mxu0 0.0
    %174 = vmatprep.subr.mxu0 0.0
    %175 = vmatpush1.msra.mxu0 0.0
    %176 = vmatprep.subr.mxu0 0.0
    %177 = vmatpush1.msra.mxu0 0.0
    %178 = vmatprep.subr.mxu0 0.0
    %179 = vmatpush1.msra.mxu0 0.0
    %180 = vmatprep.subr.mxu0 0.0
    %181 = vmatpush1.msra.mxu0 0.0
    %182 = vmatprep.subr.mxu0 0.0
    %183 = vmatpush1.msra.mxu0 0.0
    %184 = vmatprep.subr.mxu0 0.0
    %185 = vmatpush1.msra.mxu0 0.0
    %186 = vmatprep.subr.mxu0 0.0
    %187 = vmatpush1.msra.mxu0 0.0
    %188 = vmatprep.subr.mxu0 0.0
    %189 = vmatpush1.msra.mxu0 0.0
    %190 = vmatprep.subr.mxu0 0.0
    %191 = vmatpush1.msra.mxu0 0.0
    %192 = vmatprep.subr.mxu0 0.0
    %193 = vmatpush1.msra.mxu0 0.0
    %194 = vmatprep.subr.mxu0 0.0
    %195 = vmatpush1.msra.mxu0 0.0
    %196 = vmatprep.subr.mxu0 0.0
    %197 = vmatpush1.msra.mxu0 0.0
    %198 = vmatprep.subr.mxu0 0.0
    %199 = vmatpush1.msra.mxu0 0.0
    %200 = vmatprep.subr.mxu0 0.0
    %201 = vmatpush1.msra.mxu0 0.0
    %202 = vmatprep.subr.mxu0 0.0
    %203 = vmatpush1.msra.mxu0 0.0
    %204 = vmatprep.subr.mxu0 0.0
    %205 = vmatpush1.msra.mxu0 0.0
    %206 = vmatprep.subr.mxu0 0.0
    %207 = vmatpush1.msra.mxu0 0.0
    %208 = vmatprep.subr.mxu0 0.0
    %209 = vmatpush1.msra.mxu0 0.0
    %210 = vmatprep.subr.mxu0 0.0
    %211 = vmatpush1.msra.mxu0 0.0
    %212 = vmatprep.subr.mxu0 0.0
    %213 = vmatpush1.msra.mxu0 0.0
    %214 = vmatprep.subr.mxu0 0.0
    %215 = vmatpush1.msra.mxu0 0.0
    %216 = vmatprep.mubr.f32.mxu0 0.0
    %217 = vmatmul.mubr.f32.gmra.mrb[0].mxu0 %v147
    %v218 = vpop.f32.mrb[0].mxu0
    %v219 = vadd.f32 %v137, %v218
    %v220 = vpop.f32.mrb[0].mxu0
    %221 = vmatprep.mubr.f32.mxu0 0.0
    %222 = vmatmul.mubr.f32.gmra.mrb[0].mxu0 %v150
    %v223 = vpop.f32.mrb[0].mxu0
    %v224 = vadd.f32 %v142, %v223
    %v225 = vpop.f32.mrb[0].mxu0
    %226 = vdwg.mxu0
    %v227 = vld [vmem:[%s0] sm:$0x1]
    %v228 = vld [vmem:[%s0 + $0x1] sm:$0x1]
    %v231 = vlaneseq
    %v232 = vshrl.u32 %v231, 7
    %v233 = vsub.s32 0, %v232
    %v234 = vrot.slane %v227, %v233
    %v235 = vlaneseq
    %v236 = vshrl.u32 %v235, 7
    %v237 = vsub.s32 0, %v236
    %v238 = vrot.slane %v228, %v237
    %v241 = vadd.f32 %v219, %v234
    %v242 = vadd.f32 %v224, %v238
    %v243 = vtanh.pop %v241
    %v244 = vtanh.pop %v242
    %v245 = vld [vmem:[%s6] sm:$0x1]
    %s246 = sld [smem:[#allocation2]]
    %v247 = vstv %s246
    %v249 = vsel %vm145, %v245, 0
    %v252 = vsel %vm145, %v243, 0
    %254 = vmatprep.subr.mxu0 0.0
    %255 = vmatpush1.xpose.msra.mxu0 %v252
    %256 = vmatprep.subr.mxu0 0.0
    %257 = vmatpush1.xpose.msra.mxu0 0.0
    %258 = vmatprep.subr.mxu0 0.0
    %259 = vmatpush1.xpose.msra.mxu0 0.0
    %260 = vmatprep.subr.mxu0 0.0
    %261 = vmatpush1.xpose.msra.mxu0 0.0
    %262 = vmatprep.subr.mxu0 0.0
    %263 = vmatpush1.xpose.msra.mxu0 0.0
    %264 = vmatprep.subr.mxu0 0.0
    %265 = vmatpush1.xpose.msra.mxu0 0.0
    %266 = vmatprep.subr.mxu0 0.0
    %267 = vmatpush1.xpose.msra.mxu0 0.0
    %268 = vmatprep.subr.mxu0 0.0
    %269 = vmatpush1.xpose.msra.mxu0 0.0
    %270 = vmatprep.subr.mxu0 0.0
    %271 = vmatpush1.xpose.msra.mxu0 0.0
    %272 = vmatprep.subr.mxu0 0.0
    %273 = vmatpush1.xpose.msra.mxu0 0.0
    %274 = vmatprep.subr.mxu0 0.0
    %275 = vmatpush1.xpose.msra.mxu0 0.0
    %276 = vmatprep.subr.mxu0 0.0
    %277 = vmatpush1.xpose.msra.mxu0 0.0
    %278 = vmatprep.subr.mxu0 0.0
    %279 = vmatpush1.xpose.msra.mxu0 0.0
    %280 = vmatprep.subr.mxu0 0.0
    %281 = vmatpush1.xpose.msra.mxu0 0.0
    %282 = vmatprep.subr.mxu0 0.0
    %283 = vmatpush1.xpose.msra.mxu0 0.0
    %284 = vmatprep.subr.mxu0 0.0
    %285 = vmatpush1.xpose.msra.mxu0 0.0
    %286 = vmatprep.subr.mxu0 0.0
    %287 = vmatpush1.xpose.msra.mxu0 0.0
    %288 = vmatprep.subr.mxu0 0.0
    %289 = vmatpush1.xpose.msra.mxu0 0.0
    %290 = vmatprep.subr.mxu0 0.0
    %291 = vmatpush1.xpose.msra.mxu0 0.0
    %292 = vmatprep.subr.mxu0 0.0
    %293 = vmatpush1.xpose.msra.mxu0 0.0
    %294 = vmatprep.subr.mxu0 0.0
    %295 = vmatpush1.xpose.msra.mxu0 0.0
    %296 = vmatprep.subr.mxu0 0.0
    %297 = vmatpush1.xpose.msra.mxu0 0.0
    %298 = vmatprep.subr.mxu0 0.0
    %299 = vmatpush1.xpose.msra.mxu0 0.0
    %300 = vmatprep.subr.mxu0 0.0
    %301 = vmatpush1.xpose.msra.mxu0 0.0
    %302 = vmatprep.subr.mxu0 0.0
    %303 = vmatpush1.xpose.msra.mxu0 0.0
    %304 = vmatprep.subr.mxu0 0.0
    %305 = vmatpush1.xpose.msra.mxu0 0.0
    %306 = vmatprep.subr.mxu0 0.0
    %307 = vmatpush1.xpose.msra.mxu0 0.0
    %308 = vmatprep.subr.mxu0 0.0
    %309 = vmatpush1.xpose.msra.mxu0 0.0
    %310 = vmatprep.subr.mxu0 0.0
    %311 = vmatpush1.xpose.msra.mxu0 0.0
    %312 = vmatprep.subr.mxu0 0.0
    %313 = vmatpush1.xpose.msra.mxu0 0.0
    %314 = vmatprep.subr.mxu0 0.0
    %315 = vmatpush1.xpose.msra.mxu0 0.0
    %316 = vmatprep.subr.mxu0 0.0
    %317 = vmatpush1.xpose.msra.mxu0 0.0
    %318 = vmatprep.mubr.f32.mxu0 0.0
    %319 = vmatmul.mubr.f32.gmra.mrb[0].mxu0 %v249
    %v320 = vpop.f32.mrb[0].mxu0
    %v321 = vadd.f32 %v247, %v320
    %v322 = vpop.f32.mrb[0].mxu0
    %323 = vdwg.mxu0
    %v325 = vsel %vm145, %v244, 0
    %327 = vmatprep.subr.mxu0 0.0
    %328 = vmatpush1.xpose.msra.mxu0 %v325
    %329 = vmatprep.subr.mxu0 0.0
    %330 = vmatpush1.xpose.msra.mxu0 0.0
    %331 = vmatprep.subr.mxu0 0.0
    %332 = vmatpush1.xpose.msra.mxu0 0.0
    %333 = vmatprep.subr.mxu0 0.0
    %334 = vmatpush1.xpose.msra.mxu0 0.0
    %335 = vmatprep.subr.mxu0 0.0
    %336 = vmatpush1.xpose.msra.mxu0 0.0
    %337 = vmatprep.subr.mxu0 0.0
    %338 = vmatpush1.xpose.msra.mxu0 0.0
    %339 = vmatprep.subr.mxu0 0.0
    %340 = vmatpush1.xpose.msra.mxu0 0.0
    %341 = vmatprep.subr.mxu0 0.0
    %342 = vmatpush1.xpose.msra.mxu0 0.0
    %343 = vmatprep.subr.mxu0 0.0
    %344 = vmatpush1.xpose.msra.mxu0 0.0
    %345 = vmatprep.subr.mxu0 0.0
    %346 = vmatpush1.xpose.msra.mxu0 0.0
    %347 = vmatprep.subr.mxu0 0.0
    %348 = vmatpush1.xpose.msra.mxu0 0.0
    %349 = vmatprep.subr.mxu0 0.0
    %350 = vmatpush1.xpose.msra.mxu0 0.0
    %351 = vmatprep.subr.mxu0 0.0
    %352 = vmatpush1.xpose.msra.mxu0 0.0
    %353 = vmatprep.subr.mxu0 0.0
    %354 = vmatpush1.xpose.msra.mxu0 0.0
    %355 = vmatprep.subr.mxu0 0.0
    %356 = vmatpush1.xpose.msra.mxu0 0.0
    %357 = vmatprep.subr.mxu0 0.0
    %358 = vmatpush1.xpose.msra.mxu0 0.0
    %359 = vmatprep.subr.mxu0 0.0
    %360 = vmatpush1.xpose.msra.mxu0 0.0
    %361 = vmatprep.subr.mxu0 0.0
    %362 = vmatpush1.xpose.msra.mxu0 0.0
    %363 = vmatprep.subr.mxu0 0.0
    %364 = vmatpush1.xpose.msra.mxu0 0.0
    %365 = vmatprep.subr.mxu0 0.0
    %366 = vmatpush1.xpose.msra.mxu0 0.0
    %367 = vmatprep.subr.mxu0 0.0
    %368 = vmatpush1.xpose.msra.mxu0 0.0
    %369 = vmatprep.subr.mxu0 0.0
    %370 = vmatpush1.xpose.msra.mxu0 0.0
    %371 = vmatprep.subr.mxu0 0.0
    %372 = vmatpush1.xpose.msra.mxu0 0.0
    %373 = vmatprep.subr.mxu0 0.0
    %374 = vmatpush1.xpose.msra.mxu0 0.0
    %375 = vmatprep.subr.mxu0 0.0
    %376 = vmatpush1.xpose.msra.mxu0 0.0
    %377 = vmatprep.subr.mxu0 0.0
    %378 = vmatpush1.xpose.msra.mxu0 0.0
    %379 = vmatprep.subr.mxu0 0.0
    %380 = vmatpush1.xpose.msra.mxu0 0.0
    %381 = vmatprep.subr.mxu0 0.0
    %382 = vmatpush1.xpose.msra.mxu0 0.0
    %383 = vmatprep.subr.mxu0 0.0
    %384 = vmatpush1.xpose.msra.mxu0 0.0
    %385 = vmatprep.subr.mxu0 0.0
    %386 = vmatpush1.xpose.msra.mxu0 0.0
    %387 = vmatprep.subr.mxu0 0.0
    %388 = vmatpush1.xpose.msra.mxu0 0.0
    %389 = vmatprep.subr.mxu0 0.0
    %390 = vmatpush1.xpose.msra.mxu0 0.0
    %391 = vmatprep.mubr.f32.mxu0 0.0
    %392 = vmatmul.mubr.f32.gmra.mrb[0].mxu0 %v249
    %v393 = vpop.f32.mrb[0].mxu0
    %v394 = vadd.f32 %v247, %v393
    %v395 = vpop.f32.mrb[0].mxu0
    %396 = vdwg.mxu0
    %v397 = vld [vmem:[%s3] sm:$0x1]
    %v398 = vld [vmem:[%s3 + $0x1] sm:$0x1]
    %vm399 = vcmask 57344
    %v400 = vsel %vm399, %v321, -inf
    %401 = vmax.xlane.f32.xlu0 %v400
    %v402 = vpop.xlane.xlu0 %401
    %v403 = vsel %vm399, %v394, -inf
    %404 = vmax.xlane.f32.xlu0 %v403
    %v405 = vpop.xlane.xlu0 %404
    %v406 = vsub.f32 %v321, %v402
    %v407 = vsub.f32 %v394, %v405
    %v408 = vmul.f32 %v406, 1.442695
    %v409 = vpow.pop %v408
    %v410 = vmul.f32 %v407, 1.442695
    %v411 = vpow.pop %v410
    %v412 = vmul.f32 %v409, %v397
    %v413 = vmul.f32 %v411, %v398
    %v414 = vsel %vm399, %v412, 0.0
    %415 = vadd.xlane.f32.xlu0 %v414
    %v416 = vpop.xlane.xlu0 %415
    %v417 = vsel %vm399, %v413, 0.0
    %418 = vadd.xlane.f32.xlu0 %v417
    %v419 = vpop.xlane.xlu0 %418
    %v420 = vrcp.pop %v416
    %v421 = vmul.f32 %v412, %v420
    %v422 = vrcp.pop %v419
    %v423 = vmul.f32 %v413, %v422
    %424 = vst.msk [vmem:[#allocation5] sm:$0x1] %vm399, %v421
    %425 = vst.msk [vmem:[#allocation5 + $0x1] sm:$0x1] %vm399, %v423
    %vm426 = vcmask 64512
    %v428 = vsel %vm426, %v421, 0
    %430 = vmatprep.subr.mxu0 0.0
    %431 = vmatpush1.msra.mxu0 %v34
    %432 = vmatprep.subr.mxu0 0.0
    %433 = vmatpush1.msra.mxu0 0.0
    %434 = vmatprep.subr.mxu0 0.0
    %435 = vmatpush1.msra.mxu0 0.0
    %436 = vmatprep.subr.mxu0 0.0
    %437 = vmatpush1.msra.mxu0 0.0
    %438 = vmatprep.subr.mxu0 0.0
    %439 = vmatpush1.msra.mxu0 0.0
    %440 = vmatprep.subr.mxu0 0.0
    %441 = vmatpush1.msra.mxu0 0.0
    %442 = vmatprep.subr.mxu0 0.0
    %443 = vmatpush1.msra.mxu0 0.0
    %444 = vmatprep.subr.mxu0 0.0
    %445 = vmatpush1.msra.mxu0 0.0
    %446 = vmatprep.subr.mxu0 0.0
    %447 = vmatpush1.msra.mxu0 0.0
    %448 = vmatprep.subr.mxu0 0.0
    %449 = vmatpush1.msra.mxu0 0.0
    %450 = vmatprep.subr.mxu0 0.0
    %451 = vmatpush1.msra.mxu0 0.0
    %452 = vmatprep.subr.mxu0 0.0
    %453 = vmatpush1.msra.mxu0 0.0
    %454 = vmatprep.subr.mxu0 0.0
    %455 = vmatpush1.msra.mxu0 0.0
    %456 = vmatprep.subr.mxu0 0.0
    %457 = vmatpush1.msra.mxu0 0.0
    %458 = vmatprep.subr.mxu0 0.0
    %459 = vmatpush1.msra.mxu0 0.0
    %460 = vmatprep.subr.mxu0 0.0
    %461 = vmatpush1.msra.mxu0 0.0
    %462 = vmatprep.subr.mxu0 0.0
    %463 = vmatpush1.msra.mxu0 0.0
    %464 = vmatprep.subr.mxu0 0.0
    %465 = vmatpush1.msra.mxu0 0.0
    %466 = vmatprep.subr.mxu0 0.0
    %467 = vmatpush1.msra.mxu0 0.0
    %468 = vmatprep.subr.mxu0 0.0
    %469 = vmatpush1.msra.mxu0 0.0
    %470 = vmatprep.subr.mxu0 0.0
    %471 = vmatpush1.msra.mxu0 0.0
    %472 = vmatprep.subr.mxu0 0.0
    %473 = vmatpush1.msra.mxu0 0.0
    %474 = vmatprep.subr.mxu0 0.0
    %475 = vmatpush1.msra.mxu0 0.0
    %476 = vmatprep.subr.mxu0 0.0
    %477 = vmatpush1.msra.mxu0 0.0
    %478 = vmatprep.subr.mxu0 0.0
    %479 = vmatpush1.msra.mxu0 0.0
    %480 = vmatprep.subr.mxu0 0.0
    %481 = vmatpush1.msra.mxu0 0.0
    %482 = vmatprep.subr.mxu0 0.0
    %483 = vmatpush1.msra.mxu0 0.0
    %484 = vmatprep.subr.mxu0 0.0
    %485 = vmatpush1.msra.mxu0 0.0
    %486 = vmatprep.subr.mxu0 0.0
    %487 = vmatpush1.msra.mxu0 0.0
    %488 = vmatprep.subr.mxu0 0.0
    %489 = vmatpush1.msra.mxu0 0.0
    %490 = vmatprep.subr.mxu0 0.0
    %491 = vmatpush1.msra.mxu0 0.0
    %492 = vmatprep.subr.mxu0 0.0
    %493 = vmatpush1.msra.mxu0 0.0
    %494 = vmatprep.mubr.f32.mxu0 0.0
    %495 = vmatmul.mubr.f32.gmra.mrb[0].mxu0 %v428
    %v496 = vpop.f32.mrb[0].mxu0
    %v497 = vadd.f32 0.0, %v496
    %v498 = vpop.f32.mrb[0].mxu0
    %499 = vdwg.mxu0
    %v501 = vsel %vm426, %v423, 0
    %503 = vmatprep.subr.mxu0 0.0
    %504 = vmatpush1.msra.mxu0 %v35
    %505 = vmatprep.subr.mxu0 0.0
    %506 = vmatpush1.msra.mxu0 0.0
    %507 = vmatprep.subr.mxu0 0.0
    %508 = vmatpush1.msra.mxu0 0.0
    %509 = vmatprep.subr.mxu0 0.0
    %510 = vmatpush1.msra.mxu0 0.0
    %511 = vmatprep.subr.mxu0 0.0
    %512 = vmatpush1.msra.mxu0 0.0
    %513 = vmatprep.subr.mxu0 0.0
    %514 = vmatpush1.msra.mxu0 0.0
    %515 = vmatprep.subr.mxu0 0.0
    %516 = vmatpush1.msra.mxu0 0.0
    %517 = vmatprep.subr.mxu0 0.0
    %518 = vmatpush1.msra.mxu0 0.0
    %519 = vmatprep.subr.mxu0 0.0
    %520 = vmatpush1.msra.mxu0 0.0
    %521 = vmatprep.subr.mxu0 0.0
    %522 = vmatpush1.msra.mxu0 0.0
    %523 = vmatprep.subr.mxu0 0.0
    %524 = vmatpush1.msra.mxu0 0.0
    %525 = vmatprep.subr.mxu0 0.0
    %526 = vmatpush1.msra.mxu0 0.0
    %527 = vmatprep.subr.mxu0 0.0
    %528 = vmatpush1.msra.mxu0 0.0
    %529 = vmatprep.subr.mxu0 0.0
    %530 = vmatpush1.msra.mxu0 0.0
    %531 = vmatprep.subr.mxu0 0.0
    %532 = vmatpush1.msra.mxu0 0.0
    %533 = vmatprep.subr.mxu0 0.0
    %534 = vmatpush1.msra.mxu0 0.0
    %535 = vmatprep.subr.mxu0 0.0
    %536 = vmatpush1.msra.mxu0 0.0
    %537 = vmatprep.subr.mxu0 0.0
    %538 = vmatpush1.msra.mxu0 0.0
    %539 = vmatprep.subr.mxu0 0.0
    %540 = vmatpush1.msra.mxu0 0.0
    %541 = vmatprep.subr.mxu0 0.0
    %542 = vmatpush1.msra.mxu0 0.0
    %543 = vmatprep.subr.mxu0 0.0
    %544 = vmatpush1.msra.mxu0 0.0
    %545 = vmatprep.subr.mxu0 0.0
    %546 = vmatpush1.msra.mxu0 0.0
    %547 = vmatprep.subr.mxu0 0.0
    %548 = vmatpush1.msra.mxu0 0.0
    %549 = vmatprep.subr.mxu0 0.0
    %550 = vmatpush1.msra.mxu0 0.0
    %551 = vmatprep.subr.mxu0 0.0
    %552 = vmatpush1.msra.mxu0 0.0
    %553 = vmatprep.subr.mxu0 0.0
    %554 = vmatpush1.msra.mxu0 0.0
    %555 = vmatprep.subr.mxu0 0.0
    %556 = vmatpush1.msra.mxu0 0.0
    %557 = vmatprep.subr.mxu0 0.0
    %558 = vmatpush1.msra.mxu0 0.0
    %559 = vmatprep.subr.mxu0 0.0
    %560 = vmatpush1.msra.mxu0 0.0
    %561 = vmatprep.subr.mxu0 0.0
    %562 = vmatpush1.msra.mxu0 0.0
    %563 = vmatprep.subr.mxu0 0.0
    %564 = vmatpush1.msra.mxu0 0.0
    %565 = vmatprep.subr.mxu0 0.0
    %566 = vmatpush1.msra.mxu0 0.0
    %567 = vmatprep.mubr.f32.mxu0 0.0
    %568 = vmatmul.mubr.f32.gmra.mrb[0].mxu0 %v501
    %v569 = vpop.f32.mrb[0].mxu0
    %v570 = vadd.f32 0.0, %v569
    %v571 = vpop.f32.mrb[0].mxu0
    %572 = vdwg.mxu0
    %vm573 = vcmask 516096
    %574 = vst.msk [vmem:[#allocation3] sm:$0x1] %vm573, %v497
    %575 = vst.msk [vmem:[#allocation3 + $0x1] sm:$0x1] %vm573, %v570
    // Predicated region
    $region34: #{tpu_custom_call.1} parent=1 // pred_check
      _
    $region35: #{tpu_custom_call.1} parent=1 // pred_check_branch
      %577 = sbr.rel (0) target = $region37
    $region36: #{tpu_custom_call.1} parent=1 // pred_region
      %s579 = ssub.s32 32, 32
      %580 = vsyncadd [#allocation4], %s579
      %s581 = sshll.u32 [#allocation3], 4
      %s582 = int_to_ptr.vmem [resolvable:$true] %s581
      %587 = dma.vmem_to_hbm [thread:$0]  %s582, 32, %s8, [#allocation4], 16, 16, 1
    $region37: #{tpu_custom_call.1} parent=1 // pred_fallthru
      _
    // Predicated region
    $region38: #{tpu_custom_call.1} parent=1 // pred_check
      _
    $region39: #{tpu_custom_call.1} parent=1 // pred_check_branch
      %589 = sbr.rel (0) target = $region41
    $region40: #{tpu_custom_call.1} parent=1 // pred_region
      %s591 = ssub.s32 32, 32
      %592 = vsyncadd [#allocation6], %s591
      %s593 = sshll.u32 [#allocation5], 4
      %s594 = int_to_ptr.vmem [resolvable:$true] %s593
      %599 = dma.vmem_to_hbm [thread:$0]  %s594, 32, %s9, [#allocation6], 16, 16, 1
    $region41: #{tpu_custom_call.1} parent=1 // pred_fallthru
      _
    // Predicated region
    $region42: #{tpu_custom_call.1} parent=1 // pred_check
      _
    $region43: #{tpu_custom_call.1} parent=1 // pred_check_branch
      %601 = sbr.rel (0) target = $region45
    $region44: #{tpu_custom_call.1} parent=1 // pred_region
      %602 = dma.done [#allocation4], 32
    $region45: #{tpu_custom_call.1} parent=1 // pred_fallthru
      _
    // Predicated region
    $region46: #{tpu_custom_call.1} parent=1 // pred_check
      _
    $region47: #{tpu_custom_call.1} parent=1 // pred_check_branch
      %604 = sbr.rel (0) target = $region49
    $region48: #{tpu_custom_call.1} parent=1 // pred_region
      %605 = dma.done [#allocation6], 32
    $region49: #{tpu_custom_call.1} parent=1 // pred_fallthru
      _
    %606 = vsyncpa [#allocation4], 1
    %607 = vsyncpa [#allocation6], 1

</llo_original>
